<compile_context>
chip_gen: v7x
topology: tpu7x:2x2x1
jax: 0.10.0
libtpu: 0.0.40
codegen_flags: <defaults>
</compile_context>

<pallas_src>
import jax
import jax.numpy as jnp
from jax.experimental import pallas as pl
from jax.experimental.pallas import tpu as pltpu

_LANES = 128  # lane-dense last dim (full vst, no vst.msk on the logits stream)


def _select_tiling():
    """Pick (max tile rows, scoped-VMEM limit) per TPU generation."""
    try:
        kind = jax.devices()[0].device_kind.lower()
    except Exception:  # pragma: no cover - defensive
        kind = ""
    is_v5e = ("v5e" in kind) or ("v5 lite" in kind) or ("v5lite" in kind)
    if is_v5e:
        # 2 MiB/buffer -> ~12 MiB live with double-buffered x / labels / logits.
        return 4096, 28 << 20
    # v6e / v7x: 4 MiB/buffer -> ~24 MiB live; fits v6e (128 MiB) and v7x (64 MiB).
    return 8192, 48 << 20


def _dummy_model_kernel(w_ref, b_ref, nvalid_ref, x_ref, y_ref,
                        logits_ref, partial_ref):
    """One (block_rows, 128) tile: elementwise affine + (masked) partial SSE."""
    br, lanes = x_ref.shape
    tile_elems = br * lanes

    w = w_ref[0]
    b = b_ref[0]

    # int -> f32 cast in-kernel (no separate XLA convert pass over HBM).
    x = x_ref[...].astype(jnp.float32)
    logits = x * w + b
    logits_ref[...] = logits

    diff = logits - y_ref[...].astype(jnp.float32)
    sq = diff * diff

    # int32 scalar math: fine while total element count fits int32 (n_valid is int32).
    tile_start = pl.program_id(0) * tile_elems
    is_full_tile = (tile_start + tile_elems) <= nvalid_ref[0]

    @pl.when(is_full_tile)
    def _():
        # Interior tiles: no mask work at all.
        partial_ref[...] = jnp.full(partial_ref.shape, jnp.sum(sq), jnp.float32)

    @pl.when(jnp.logical_not(is_full_tile))
    def _():
        # Ragged / tail tile: mask out padded lanes and Pallas-padded OOB rows.
        remaining = nvalid_ref[0] - tile_start
        row = jax.lax.broadcasted_iota(jnp.int32, (br, lanes), 0)
        col = jax.lax.broadcasted_iota(jnp.int32, (br, lanes), 1)
        local_idx = row * lanes + col
        masked = jnp.where(local_idx < remaining, sq, 0.0)
        partial_ref[...] = jnp.full(partial_ref.shape, jnp.sum(masked), jnp.float32)


def dummy_model_forward(input_ids, labels, weight, bias, *, max_block_rows=None):
    """Returns (loss, logits) matching DummyModel.forward semantics.

    input_ids: (B, S) integer (or float) array
    labels:    (B, S) numeric array
    weight:    Linear(1,1).weight (any shape with one element)
    bias:      Linear(1,1).bias   (any shape with one element)
    """
    B, S = input_ids.shape
    n = B * S

    if max_block_rows is None:
        max_block_rows, vmem_limit = _select_tiling()
    else:
        max_block_rows = max(8, (int(max_block_rows) // 8) * 8)
        vmem_limit = 48 << 20

    rows = pl.cdiv(n, _LANES)

    # Pad only to the next lane multiple (<= 127 elements) and only when needed.
    if n % _LANES == 0:
        x2d = input_ids.reshape(rows, _LANES)   # keep original (int) dtype
        y2d = labels.reshape(rows, _LANES)
        padded = False
    else:
        pad = rows * _LANES - n
        x2d = jnp.pad(input_ids.reshape(-1), (0, pad)).reshape(rows, _LANES)
        y2d = jnp.pad(labels.reshape(-1), (0, pad)).reshape(rows, _LANES)
        padded = True

    if rows <= max_block_rows:
        block_rows = rows            # single tile == full array -> (8,128) rule ok
    else:
        block_rows = max_block_rows  # multiple of 8; ragged last block handled by Pallas
    num_tiles = pl.cdiv(rows, block_rows)

    w = weight.reshape(-1).astype(jnp.float32)
    bvec = bias.reshape(-1).astype(jnp.float32)
    n_valid = jnp.array([n], dtype=jnp.int32)

    logits2d, partials = pl.pallas_call(
        _dummy_model_kernel,
        grid=(num_tiles,),
        out_shape=(
            jax.ShapeDtypeStruct((rows, _LANES), jnp.float32),            # logits
            jax.ShapeDtypeStruct((num_tiles, 8, _LANES), jnp.float32),    # per-tile SSE
        ),
        in_specs=[
            pl.BlockSpec(memory_space=pltpu.MemorySpace.SMEM),            # weight (1,)
            pl.BlockSpec(memory_space=pltpu.MemorySpace.SMEM),            # bias   (1,)
            pl.BlockSpec(memory_space=pltpu.MemorySpace.SMEM),            # n_valid(1,)
            pl.BlockSpec((block_rows, _LANES), lambda i: (i, 0)),         # input_ids
            pl.BlockSpec((block_rows, _LANES), lambda i: (i, 0)),         # labels
        ],
        out_specs=(
            pl.BlockSpec((block_rows, _LANES), lambda i: (i, 0)),         # logits
            pl.BlockSpec((1, 8, _LANES), lambda i: (i, 0, 0)),            # partial SSE
        ),
        compiler_params=pltpu.CompilerParams(
            dimension_semantics=("parallel",),   # megacore-shardable on v7x
            vmem_limit_bytes=vmem_limit,
        ),
        cost_estimate=pl.CostEstimate(
            flops=5 * n,
            transcendentals=0,
            bytes_accessed=12 * n,   # int32 in + f32 labels + f32 logits
        ),
    )(w, bvec, n_valid, x2d, y2d)

    loss = jnp.sum(partials[:, 0, 0]) * (1.0 / n)       # mean over TRUE count
    if padded:
        logits = logits2d.reshape(-1)[:n].reshape(B, S, 1)
    else:
        logits = logits2d.reshape(B, S, 1)               # zero-cost view
    return loss, logits


if __name__ == "__main__":
    key = jax.random.PRNGKey(0)
    k_ids, k_lbl, k_w, k_b = jax.random.split(key, 4)

    def ref_forward(ids, lbl, w, b):
        x = ids.astype(jnp.float32)[..., None]
        lg = x * w.reshape(-1)[0] + b.reshape(-1)[0]
        ls = jnp.mean((lg[..., 0] - lbl.astype(jnp.float32)) ** 2)
        return ls, lg

    # Deterministic Linear(1,1) parameters (synthetic init, not a checkpoint).
    weight = jax.random.normal(k_w, (1, 1), dtype=jnp.float32)   # torch weight shape
    bias = jax.random.normal(k_b, (1,), dtype=jnp.float32)

    # 1) Small shape consistent with the trainer test (batch=2, seq=8).
    B, S = 2, 8
    input_ids = jax.random.randint(k_ids, (B, S), minval=0, maxval=100, dtype=jnp.int32)
    labels = jax.random.normal(k_lbl, (B, S), dtype=jnp.float32)
    loss, logits = dummy_model_forward(input_ids, labels, weight, bias)
    jax.block_until_ready((loss, logits))
    loss_r, logits_r = ref_forward(input_ids, labels, weight, bias)
    assert logits.shape == (B, S, 1)
    assert jnp.allclose(logits, logits_r, atol=1e-5, rtol=1e-5)
    assert jnp.allclose(loss, loss_r, atol=1e-4, rtol=1e-4)

    # 2) Ragged element count -> exercises the 128-lane pad + masked tail.
    B2, S2 = 3, 37
    ids2 = jax.random.randint(k_ids, (B2, S2), minval=0, maxval=50, dtype=jnp.int32)
    lbl2 = jax.random.normal(k_lbl, (B2, S2), dtype=jnp.float32)
    loss2, logits2 = dummy_model_forward(ids2, lbl2, weight, bias)
    jax.block_until_ready((loss2, logits2))
    loss2_r, logits2_r = ref_forward(ids2, lbl2, weight, bias)
    assert logits2.shape == (B2, S2, 1)
    assert jnp.allclose(logits2, logits2_r, atol=1e-5, rtol=1e-5)
    assert jnp.allclose(loss2, loss2_r, atol=1e-4, rtol=1e-4)

    # 3) Multi-tile grid with a ragged boundary block (forced small tile so the
    #    no-pad / Pallas-masked-boundary path runs on small data).
    B3, S3 = 35, 128
    ids3 = jax.random.randint(k_ids, (B3, S3), minval=0, maxval=10, dtype=jnp.int32)
    lbl3 = jax.random.normal(k_lbl, (B3, S3), dtype=jnp.float32)
    loss3, logits3 = dummy_model_forward(ids3, lbl3, weight, bias, max_block_rows=8)
    jax.block_until_ready((loss3, logits3))
    loss3_r, logits3_r = ref_forward(ids3, lbl3, weight, bias)
    assert logits3.shape == (B3, S3, 1)
    assert jnp.allclose(logits3, logits3_r, atol=1e-5, rtol=1e-5)
    assert jnp.allclose(loss3, loss3_r, atol=1e-4, rtol=1e-4)

    print("KERNEL_OK")
</pallas_src>

<mosaic_0001>
module attributes {stable_mosaic.version = 11 : i64} {
  func.func @_dummy_model_kernel(%arg0: i32, %arg1: memref<1xf32, #tpu.memory_space<smem>>, %arg2: memref<1xf32, #tpu.memory_space<smem>>, %arg3: memref<1xi32, #tpu.memory_space<smem>>, %arg4: memref<1x128xi32, #tpu.memory_space<vmem>>, %arg5: memref<1x128xf32, #tpu.memory_space<vmem>>, %arg6: memref<1x128xf32, #tpu.memory_space<vmem>>, %arg7: memref<1x8x128xf32, #tpu.memory_space<vmem>>) attributes {dimension_semantics = [#tpu.dimension_semantics<parallel>], iteration_bounds = array<i64: 1>, scalar_prefetch = 0 : i64, scratch_operands = 0 : i64, tpu.core_type = #tpu.core_type<tc>, window_params = [{transform_indices = @transform_0, window_bounds = array<i64: 1>}, {transform_indices = @transform_1, window_bounds = array<i64: 1>}, {transform_indices = @transform_2, window_bounds = array<i64: 1>}, {transform_indices = @transform_3, window_bounds = array<i64: 1, 128>}, {transform_indices = @transform_4, window_bounds = array<i64: 1, 128>}, {transform_indices = @transform_5, window_bounds = array<i64: 1, 128>}, {transform_indices = @transform_6, window_bounds = array<i64: 1, 8, 128>}]} {
    %c0 = arith.constant 0 : index
    %0 = memref.load %arg1[%c0] : memref<1xf32, #tpu.memory_space<smem>>
    %c0_0 = arith.constant 0 : index
    %1 = memref.load %arg2[%c0_0] : memref<1xf32, #tpu.memory_space<smem>>
    %c0_1 = arith.constant 0 : index
    %c0_2 = arith.constant 0 : index
    %2 = vector.load %arg4[%c0_1, %c0_2] : memref<1x128xi32, #tpu.memory_space<vmem>>, vector<1x128xi32>
    %3 = arith.sitofp %2 : vector<1x128xi32> to vector<1x128xf32>
    %4 = vector.broadcast %0 : f32 to vector<1x128xf32>
    %5 = arith.mulf %3, %4 : vector<1x128xf32>
    %6 = vector.broadcast %1 : f32 to vector<1x128xf32>
    %7 = arith.addf %5, %6 : vector<1x128xf32>
    %c0_3 = arith.constant 0 : index
    %c0_4 = arith.constant 0 : index
    %8 = vector.load %arg6[%c0_3, %c0_4] : memref<1x128xf32, #tpu.memory_space<vmem>>, vector<1x128xf32>
    tpu.vector_store %arg6[%c0_3, %c0_4], %7 {strides = array<i32>} : memref<1x128xf32, #tpu.memory_space<vmem>>, vector<1x128xf32>,
    %c0_5 = arith.constant 0 : index
    %c0_6 = arith.constant 0 : index
    %9 = vector.load %arg5[%c0_5, %c0_6] : memref<1x128xf32, #tpu.memory_space<vmem>>, vector<1x128xf32>
    %10 = arith.subf %7, %9 : vector<1x128xf32>
    %11 = arith.mulf %10, %10 : vector<1x128xf32>
    %c128_i32 = arith.constant 128 : i32
    %12 = arith.muli %arg0, %c128_i32 : i32
    %c128_i32_7 = arith.constant 128 : i32
    %13 = arith.addi %12, %c128_i32_7 : i32
    %c0_8 = arith.constant 0 : index
    %14 = memref.load %arg3[%c0_8] : memref<1xi32, #tpu.memory_space<smem>>
    %15 = arith.cmpi sle, %13, %14 : i32
    %16 = arith.extui %15 : i1 to i32
    %c0_i32 = arith.constant 0 : i32
    %17 = arith.cmpi ne, %16, %c0_i32 : i32
    scf.if %17 {
      %21 = vector.shape_cast %11 : vector<1x128xf32> to vector<1x1x128xf32>
      %cst = arith.constant dense<0.000000e+00> : vector<1xf32>
      %22 = vector.multi_reduction <add>, %21, %cst [1, 2] : vector<1x1x128xf32> to vector<1xf32>
      %23 = vector.shape_cast %22 : vector<1xf32> to vector<1x1x1xf32>
      %24 = vector.extract %23[0, 0, 0] : f32 from vector<1x1x1xf32>
      %25 = vector.broadcast %24 : f32 to vector<1x8x128xf32>
      %c0_10 = arith.constant 0 : index
      %c0_11 = arith.constant 0 : index
      %c0_12 = arith.constant 0 : index
      %26 = vector.load %arg7[%c0_10, %c0_11, %c0_12] : memref<1x8x128xf32, #tpu.memory_space<vmem>>, vector<1x8x128xf32>
      tpu.vector_store %arg7[%c0_10, %c0_11, %c0_12], %25 {strides = array<i32>} : memref<1x8x128xf32, #tpu.memory_space<vmem>>, vector<1x8x128xf32>,
    } else {
    }
    %true = arith.constant true
    %18 = arith.xori %15, %true : i1
    %19 = arith.extui %18 : i1 to i32
    %c0_i32_9 = arith.constant 0 : i32
    %20 = arith.cmpi ne, %19, %c0_i32_9 : i32
    scf.if %20 {
      %c0_10 = arith.constant 0 : index
      %21 = memref.load %arg3[%c0_10] : memref<1xi32, #tpu.memory_space<smem>>
      %22 = arith.subi %21, %12 : i32
      %23 = tpu.iota {dimensions = array<i32: 0>} : vector<1x128xi32>
      %24 = tpu.iota {dimensions = array<i32: 1>} : vector<1x128xi32>
      %c128_i32_11 = arith.constant 128 : i32
      %25 = vector.broadcast %c128_i32_11 : i32 to vector<1x128xi32>
      %26 = arith.muli %23, %25 : vector<1x128xi32>
      %27 = arith.addi %26, %24 : vector<1x128xi32>
      %28 = vector.broadcast %22 : i32 to vector<1x128xi32>
      %29 = arith.cmpi slt, %27, %28 : vector<1x128xi32>
      %cst = arith.constant 0.000000e+00 : f32
      %30 = vector.broadcast %cst : f32 to vector<1x128xf32>
      %31 = arith.select %29, %11, %30 : vector<1x128xi1>, vector<1x128xf32>
      %32 = vector.shape_cast %31 : vector<1x128xf32> to vector<1x1x128xf32>
      %cst_12 = arith.constant dense<0.000000e+00> : vector<1xf32>
      %33 = vector.multi_reduction <add>, %32, %cst_12 [1, 2] : vector<1x1x128xf32> to vector<1xf32>
      %34 = vector.shape_cast %33 : vector<1xf32> to vector<1x1x1xf32>
      %35 = vector.extract %34[0, 0, 0] : f32 from vector<1x1x1xf32>
      %36 = vector.broadcast %35 : f32 to vector<1x8x128xf32>
      %c0_13 = arith.constant 0 : index
      %c0_14 = arith.constant 0 : index
      %c0_15 = arith.constant 0 : index
      %37 = vector.load %arg7[%c0_13, %c0_14, %c0_15] : memref<1x8x128xf32, #tpu.memory_space<vmem>>, vector<1x8x128xf32>
      tpu.vector_store %arg7[%c0_13, %c0_14, %c0_15], %36 {strides = array<i32>} : memref<1x8x128xf32, #tpu.memory_space<vmem>>, vector<1x8x128xf32>,
    } else {
    }
    return
  }
  func.func @transform_0(%arg0: i32) -> i32 {
    %c0_i32 = arith.constant 0 : i32
    %c0_i32_0 = arith.constant 0 : i32
    return %c0_i32 : i32
  }
  func.func @transform_1(%arg0: i32) -> i32 {
    %c0_i32 = arith.constant 0 : i32
    %c0_i32_0 = arith.constant 0 : i32
    return %c0_i32 : i32
  }
  func.func @transform_2(%arg0: i32) -> i32 {
    %c0_i32 = arith.constant 0 : i32
    %c0_i32_0 = arith.constant 0 : i32
    return %c0_i32 : i32
  }
  func.func @transform_3(%arg0: i32) -> (i32, i32) {
    %c0_i32 = arith.constant 0 : i32
    %c0_i32_0 = arith.constant 0 : i32
    return %arg0, %c0_i32 : i32, i32
  }
  func.func @transform_4(%arg0: i32) -> (i32, i32) {
    %c0_i32 = arith.constant 0 : i32
    %c0_i32_0 = arith.constant 0 : i32
    return %arg0, %c0_i32 : i32, i32
  }
  func.func @transform_5(%arg0: i32) -> (i32, i32) {
    %c0_i32 = arith.constant 0 : i32
    %c0_i32_0 = arith.constant 0 : i32
    return %arg0, %c0_i32 : i32, i32
  }
  func.func @transform_6(%arg0: i32) -> (i32, i32, i32) {
    %c0_i32 = arith.constant 0 : i32
    %c0_i32_0 = arith.constant 0 : i32
    %c0_i32_1 = arith.constant 0 : i32
    return %arg0, %c0_i32, %c0_i32_0 : i32, i32, i32
  }
}

</mosaic_0001>

<llo_original>
// kernel: tpu_custom_call.1
$region0: #{tpu_custom_call.1}
  #allocation0 [shape = 'u32[]', space=smem, size = 0x4, offset = 0x4, fixed_abs, tag = 'smem constant byte address 0x4 - core index']
  #allocation1 [shape = 'u32[144,128]{1,0:T(1,128)}', space=vmem, size = 0x12000, scoped, tag = 'internal scratch']
  #allocation2 [shape = 'f32[1]{0:T(128)S(6)}', space=smem, size = 0x200, scoped, tag = 'scoped memory for tpu_custom_call.1']
  #allocation3 [shape = 'f32[1]{0:T(128)S(6)}', space=smem, size = 0x200, scoped, tag = 'scoped memory for tpu_custom_call.1']
  #allocation4 [shape = 's32[1]{0:T(128)S(6)}', space=smem, size = 0x200, scoped, tag = 'scoped memory for tpu_custom_call.1']
  %s0 = inlined_call_operand.<no memory space> [shape: f32[1], index: 0, kind: input, shape index: {}]
  %s1 = inlined_call_operand.<no memory space> [shape: f32[1], index: 1, kind: input, shape index: {}]
  %s2 = inlined_call_operand.<no memory space> [shape: s32[1], index: 2, kind: input, shape index: {}]
  %s3 = inlined_call_operand.vmem [shape: s32[1,128], index: 3, kind: input, shape index: {}]
  %s4 = inlined_call_operand.vmem [shape: f32[1,128], index: 4, kind: input, shape index: {}]
  %s5 = inlined_call_operand.hbm [shape: f32[1,128], index: 5, kind: output, shape index: {0}]
  %s6 = inlined_call_operand.hbm [shape: f32[1,8,128], index: 6, kind: output, shape index: {1}]
  %7 = xla_tuple %s5, %s6
  %s8 = sld [smem:[#allocation0]]
  $region46: #{tpu_custom_call.1} parent=0
    _
  %s10 = ssub.s32 1, %s8
  %s11 = scalar_select 0, %s10, %s8
  %12 = sst [smem:[#allocation2]] %s0
  %13 = sst [smem:[#allocation3]] %s1
  %14 = sst [smem:[#allocation4]] %s2
  $region1: #{tpu_custom_call.1} parent=0
    #allocation5 [shape = 'u8[512]{0}', space=vmem, size = 0x400, scoped, tag = 'output window, operand 0, single buffered']
    #allocation6 [shape = 's32[1]{0}', space=sflag, size = 0x4, scoped, tag = 'scoped memory for tpu_custom_call.1']
    #allocation7 [shape = 'u8[4096]{0}', space=vmem, size = 0x1000, scoped, tag = 'output window, operand 1, single buffered']
    #allocation8 [shape = 's32[1]{0}', space=sflag, size = 0x4, scoped, tag = 'scoped memory for tpu_custom_call.1']
    %15 = vsyncpa [#allocation6], 0
    %16 = vsyncpa [#allocation8], 0
    // Predicated region
    $region2: #{tpu_custom_call.1} parent=1 // pred_check
      _
    $region3: #{tpu_custom_call.1} parent=1 // pred_check_branch
      %18 = sbr.rel (0) target = $region5
    $region4: #{tpu_custom_call.1} parent=1 // pred_region
      _
    $region5: #{tpu_custom_call.1} parent=1 // pred_fallthru
      _
    // Predicated region
    $region6: #{tpu_custom_call.1} parent=1 // pred_check
      _
    $region7: #{tpu_custom_call.1} parent=1 // pred_check_branch
      %20 = sbr.rel (0) target = $region9
    $region8: #{tpu_custom_call.1} parent=1 // pred_region
      _
    $region9: #{tpu_custom_call.1} parent=1 // pred_fallthru
      _
    // Predicated region
    $region10: #{tpu_custom_call.1} parent=1 // pred_check
      _
    $region11: #{tpu_custom_call.1} parent=1 // pred_check_branch
      %22 = sbr.rel (0) target = $region13
    $region12: #{tpu_custom_call.1} parent=1 // pred_region
      _
    $region13: #{tpu_custom_call.1} parent=1 // pred_fallthru
      _
    // Predicated region
    $region14: #{tpu_custom_call.1} parent=1 // pred_check
      _
    $region15: #{tpu_custom_call.1} parent=1 // pred_check_branch
      %24 = sbr.rel (0) target = $region17
    $region16: #{tpu_custom_call.1} parent=1 // pred_region
      _
    $region17: #{tpu_custom_call.1} parent=1 // pred_fallthru
      _
    // Predicated region
    $region18: #{tpu_custom_call.1} parent=1 // pred_check
      _
    $region19: #{tpu_custom_call.1} parent=1 // pred_check_branch
      %26 = sbr.rel (0) target = $region21
    $region20: #{tpu_custom_call.1} parent=1 // pred_region
      _
    $region21: #{tpu_custom_call.1} parent=1 // pred_fallthru
      _
    %s27 = sld [smem:[#allocation2]]
    %s28 = sld [smem:[#allocation3]]
    %v29 = vld [vmem:[%s3] sm:$0x1]
    %v30 = vcvt.s32.f32 %v29
    %v31 = vstv %s27
    %v32 = vmul.f32 %v30, %v31
    %v33 = vstv %s28
    %v34 = vadd.f32 %v32, %v33
    %35 = vst [vmem:[#allocation5] sm:$0x1] %v34
    %v36 = vld [vmem:[%s4] sm:$0x1]
    %v37 = vsub.f32 %v34, %v36
    %v38 = vmul.f32 %v37, %v37
    %s39 = smul.u32 0, 128
    %s40 = sadd.s32 %s39, 128
    %s41 = sld [smem:[#allocation4]]
    %p42 = scmp.le.s32.totalorder %s40, %s41
    // Predicated region
    $region22: #{tpu_custom_call.1} parent=1 // pred_check
      %p43 = pneg %p42
    $region23: #{tpu_custom_call.1} parent=1 // pred_check_branch
      %45 = sbr.rel (%p43) target = $region25
    $region24: #{tpu_custom_call.1} parent=1 // pred_region
      %vm46 = vcmask 1040384
      %v47 = vsel %vm46, %v38, 0.0
      %48 = vadd.xlane.f32.xlu0 %v47
      %v49 = vpop.xlane.xlu0 %48
      %v50 = vrot.slane %v49, 4
      %v51 = vadd.f32 %v49, %v50
      %v52 = vrot.slane %v51, 2
      %v53 = vadd.f32 %v51, %v52
      %v54 = vrot.slane %v53, 1
      %v55 = vadd.f32 %v53, %v54
      %s56 = vtos %v55
      %v57 = vstv %s56
      %58 = vst [vmem:[#allocation7] sm:$0xff] %v57
    $region25: #{tpu_custom_call.1} parent=1 // pred_fallthru
      _
    %p59 = scmp.gt.s32.totalorder %s40, %s41
    // Predicated region
    $region26: #{tpu_custom_call.1} parent=1 // pred_check
      %p60 = pneg %p59
    $region27: #{tpu_custom_call.1} parent=1 // pred_check_branch
      %62 = sbr.rel (%p60) target = $region29
    $region28: #{tpu_custom_call.1} parent=1 // pred_region
      %s63 = sld [smem:[#allocation4]]
      %s64 = ssub.s32 %s63, %s39
      %v65 = vlaneseq
      %v66 = vshrl.u32 %v65, 7
      %v67 = vlaneseq
      %v68 = vand.u32 %v67, 127
      %v69 = vmul.u32 %v66, 128
      %v70 = vadd.s32 %v69, %v68
      %v71 = vstv %s64
      %vm72 = vcmp.lt.s32.totalorder %v70, %v71
      %v73 = vsel %vm72, %v38, 0.0
      %vm74 = vcmask 1040384
      %v75 = vsel %vm74, %v73, 0.0
      %76 = vadd.xlane.f32.xlu0 %v75
      %v77 = vpop.xlane.xlu0 %76
      %v78 = vrot.slane %v77, 4
      %v79 = vadd.f32 %v77, %v78
      %v80 = vrot.slane %v79, 2
      %v81 = vadd.f32 %v79, %v80
      %v82 = vrot.slane %v81, 1
      %v83 = vadd.f32 %v81, %v82
      %s84 = vtos %v83
      %v85 = vstv %s84
      %86 = vst [vmem:[#allocation7] sm:$0xff] %v85
    $region29: #{tpu_custom_call.1} parent=1 // pred_fallthru
      _
    // Predicated region
    $region30: #{tpu_custom_call.1} parent=1 // pred_check
      _
    $region31: #{tpu_custom_call.1} parent=1 // pred_check_branch
      %88 = sbr.rel (0) target = $region33
    $region32: #{tpu_custom_call.1} parent=1 // pred_region
      %s90 = ssub.s32 16, 16
      %91 = vsyncadd [#allocation6], %s90
      %s93 = sshll.u32 [#allocation5], 4
      %s94 = int_to_ptr.vmem [resolvable:$true] %s93
      %96 = dma.vmem_to_hbm [thread:$0]  %s94, 16, %s5, [#allocation6]
    $region33: #{tpu_custom_call.1} parent=1 // pred_fallthru
      _
    // Predicated region
    $region34: #{tpu_custom_call.1} parent=1 // pred_check
      _
    $region35: #{tpu_custom_call.1} parent=1 // pred_check_branch
      %98 = sbr.rel (0) target = $region37
    $region36: #{tpu_custom_call.1} parent=1 // pred_region
      %s100 = ssub.s32 128, 128
      %101 = vsyncadd [#allocation8], %s100
      %s103 = sshll.u32 [#allocation7], 4
      %s104 = int_to_ptr.vmem [resolvable:$true] %s103
      %106 = dma.vmem_to_hbm [thread:$0]  %s104, 128, %s6, [#allocation8]
    $region37: #{tpu_custom_call.1} parent=1 // pred_fallthru
      _
    // Predicated region
    $region38: #{tpu_custom_call.1} parent=1 // pred_check
      _
    $region39: #{tpu_custom_call.1} parent=1 // pred_check_branch
      %108 = sbr.rel (0) target = $region41
    $region40: #{tpu_custom_call.1} parent=1 // pred_region
      %109 = dma.done [#allocation6], 16
    $region41: #{tpu_custom_call.1} parent=1 // pred_fallthru
      _
    // Predicated region
    $region42: #{tpu_custom_call.1} parent=1 // pred_check
      _
    $region43: #{tpu_custom_call.1} parent=1 // pred_check_branch
      %111 = sbr.rel (0) target = $region45
    $region44: #{tpu_custom_call.1} parent=1 // pred_region
      %112 = dma.done [#allocation8], 128
    $region45: #{tpu_custom_call.1} parent=1 // pred_fallthru
      _
    %113 = vsyncpa [#allocation6], 1
    %114 = vsyncpa [#allocation8], 1

</llo_original>
